<compile_context>
chip_gen: v6e
topology: v6e:2x2x1
jax: 0.10.0
libtpu: 0.0.40
codegen_flags: <defaults>
</compile_context>

<pallas_src>
import jax
import jax.numpy as jnp
from jax.experimental import pallas as pl
from jax.experimental.pallas import tpu as pltpu


def _shared_modulation_kernel(x_ref, w_ref, b_ref, o_ref):
    # x_ref: (2B, D)          stacked [domain; task] prompts
    # w_ref: (D, L*D)         all layer weights, contraction on stored layout
    # b_ref: (1, L*D)         all layer biases
    # o_ref: (2B, L*D)        lane-dense fused output slab
    y = jnp.dot(x_ref[...], w_ref[...], preferred_element_type=jnp.float32)
    o_ref[...] = (y + b_ref[...]).astype(o_ref.dtype)


def shared_modulation_network(domain_prompt, task_prompt, weights, biases):
    """domain_prompt, task_prompt: (B, D); weights: (L, D_out, D_in); biases: (L, D).

    Returns (list of L arrays (B, D), list of L arrays (B, D)) matching the
    PyTorch module's (modulated_domain_prompts, modulated_task_prompts).
    """
    B, D = domain_prompt.shape
    L = weights.shape[0]

    # Wrapper-side (one-time, outside the kernel) layout plumbing:
    #   W_cat[i, l*D + o] = weights[l, o, i]   -> contraction on x's last dim
    w_cat = jnp.transpose(weights, (2, 0, 1)).reshape(D, L * D)
    b_row = biases.reshape(1, L * D)
    x_stacked = jnp.concatenate([domain_prompt, task_prompt], axis=0)  # (2B, D)

    flops = 2 * (2 * B) * D * (L * D)
    bytes_accessed = 4 * (2 * B * D + D * L * D + L * D + 2 * B * L * D)

    out = pl.pallas_call(
        _shared_modulation_kernel,
        out_shape=jax.ShapeDtypeStruct((2 * B, L * D), domain_prompt.dtype),
        in_specs=[
            pl.BlockSpec((2 * B, D), lambda: (0, 0)),     # stacked prompts
            pl.BlockSpec((D, L * D), lambda: (0, 0)),     # packed weights
            pl.BlockSpec((1, L * D), lambda: (0, 0)),     # packed biases
        ],
        out_specs=pl.BlockSpec((2 * B, L * D), lambda: (0, 0)),
        cost_estimate=pl.CostEstimate(
            flops=flops, transcendentals=0, bytes_accessed=bytes_accessed),
    )(x_stacked, w_cat, b_row)

    # Split fused slab back into per-layer, per-prompt outputs.
    out_d = out[:B].reshape(B, L, D).transpose(1, 0, 2)   # (L, B, D)
    out_t = out[B:].reshape(B, L, D).transpose(1, 0, 2)   # (L, B, D)

    modulated_domain_prompts = [out_d[i] for i in range(L)]
    modulated_task_prompts = [out_t[i] for i in range(L)]
    return modulated_domain_prompts, modulated_task_prompts


def _reference(domain_prompt, task_prompt, weights, biases):
    d_outs, t_outs = [], []
    for l in range(weights.shape[0]):
        w, b = weights[l], biases[l]
        d_outs.append(domain_prompt @ w.T + b)
        t_outs.append(task_prompt @ w.T + b)
    return d_outs, t_outs


if __name__ == "__main__":
    key = jax.random.PRNGKey(0)
    B = 2            # batch of prompt tokens
    prompt_dim = 32
    num_layers = 3

    k1, k2, k3, k4 = jax.random.split(key, 4)
    domain_prompt = jax.random.normal(k1, (B, prompt_dim), dtype=jnp.float32)
    task_prompt = jax.random.normal(k2, (B, prompt_dim), dtype=jnp.float32)
    # Deterministic "nn.Linear"-shaped parameters: W_l (out, in), b_l (out,)
    bound = 1.0 / jnp.sqrt(prompt_dim)
    weights = jax.random.uniform(
        k3, (num_layers, prompt_dim, prompt_dim),
        minval=-bound, maxval=bound, dtype=jnp.float32)
    biases = jax.random.uniform(
        k4, (num_layers, prompt_dim),
        minval=-bound, maxval=bound, dtype=jnp.float32)

    d_outs, t_outs = shared_modulation_network(
        domain_prompt, task_prompt, weights, biases)
    jax.block_until_ready(d_outs)
    jax.block_until_ready(t_outs)

    # Correctness check against a pure-JAX reference of the PyTorch forward.
    d_ref, t_ref = _reference(domain_prompt, task_prompt, weights, biases)
    for a, b in zip(d_outs, d_ref):
        assert jnp.allclose(a, b, atol=1e-5), "domain prompt mismatch"
    for a, b in zip(t_outs, t_ref):
        assert jnp.allclose(a, b, atol=1e-5), "task prompt mismatch"

    print("KERNEL_OK")
</pallas_src>

<mosaic_0001>
module attributes {stable_mosaic.version = 11 : i64} {
  func.func @_shared_modulation_kernel(%arg0: memref<4x32xf32, #tpu.memory_space<vmem>>, %arg1: memref<32x96xf32, #tpu.memory_space<vmem>>, %arg2: memref<1x96xf32, #tpu.memory_space<vmem>>, %arg3: memref<4x96xf32, #tpu.memory_space<vmem>>) attributes {dimension_semantics = [], scalar_prefetch = 0 : i64, scratch_operands = 0 : i64, tpu.core_type = #tpu.core_type<tc>} {
    %c0 = arith.constant 0 : index
    %c0_0 = arith.constant 0 : index
    %0 = vector.load %arg0[%c0, %c0_0] : memref<4x32xf32, #tpu.memory_space<vmem>>, vector<4x32xf32>
    %c0_1 = arith.constant 0 : index
    %c0_2 = arith.constant 0 : index
    %1 = vector.load %arg1[%c0_1, %c0_2] : memref<32x96xf32, #tpu.memory_space<vmem>>, vector<32x96xf32>
    %cst = arith.constant dense<0.000000e+00> : vector<4x96xf32>
    %2 = tpu.matmul %0, %1, %cst {dimension_numbers = #tpu.dot_dimension_numbers<[1], [0], [0], [1], [0, 0, 1, 1], [], []>} : vector<4x32xf32>, vector<32x96xf32>, vector<4x96xf32> -> vector<4x96xf32>
    %c0_3 = arith.constant 0 : index
    %c0_4 = arith.constant 0 : index
    %3 = vector.load %arg2[%c0_3, %c0_4] : memref<1x96xf32, #tpu.memory_space<vmem>>, vector<1x96xf32>
    %4 = vector.broadcast %3 : vector<1x96xf32> to vector<4x96xf32>
    %5 = arith.addf %2, %4 : vector<4x96xf32>
    %c0_5 = arith.constant 0 : index
    %c0_6 = arith.constant 0 : index
    %6 = vector.load %arg3[%c0_5, %c0_6] : memref<4x96xf32, #tpu.memory_space<vmem>>, vector<4x96xf32>
    tpu.vector_store %arg3[%c0_5, %c0_6], %5 {strides = array<i32>} : memref<4x96xf32, #tpu.memory_space<vmem>>, vector<4x96xf32>,
    return
  }
}

</mosaic_0001>

<llo_original>
// kernel: tpu_custom_call.1
$region0: #{tpu_custom_call.1}
  #allocation0 [shape = 'u32[]', space=smem, size = 0x4, offset = 0x4, fixed_abs, tag = 'smem constant byte address 0x4 - core index']
  #allocation1 [shape = 'u32[144,128]{1,0:T(1,128)}', space=vmem, size = 0x12000, scoped, tag = 'internal scratch']
  %s0 = inlined_call_operand.hbm [shape: f32[4,32], index: 0, kind: input, shape index: {}]
  %s1 = inlined_call_operand.hbm [shape: f32[32,96], index: 1, kind: input, shape index: {}]
  %s2 = inlined_call_operand.vmem [shape: f32[1,96], index: 2, kind: input, shape index: {}]
  %s3 = inlined_call_operand.hbm [shape: f32[4,96], index: 3, kind: output, shape index: {}]
  %s4 = sld [smem:[#allocation0]]
  $region30: #{tpu_custom_call.1} parent=0
    _
  %s6 = ssub.s32 1, %s4
  %s7 = scalar_select 0, %s6, %s4
  $region1: #{tpu_custom_call.1} parent=0
    #allocation2 [shape = 'u8[2048]{0}', space=vmem, size = 0x800, scoped, tag = 'input window, operand 0, single buffered']
    #allocation3 [shape = 's32[1]{0}', space=sflag, size = 0x4, scoped, tag = 'scoped memory for tpu_custom_call.1']
    #allocation4 [shape = 's32[1]{0}', space=sflag, size = 0x4, scoped, tag = 'scoped memory for tpu_custom_call.1']
    #allocation5 [shape = 'u8[16384]{0}', space=vmem, size = 0x4000, scoped, tag = 'input window, operand 1, single buffered']
    #allocation6 [shape = 's32[1]{0}', space=sflag, size = 0x4, scoped, tag = 'scoped memory for tpu_custom_call.1']
    #allocation7 [shape = 'u8[2048]{0}', space=vmem, size = 0x800, scoped, tag = 'output window, operand 0, single buffered']
    %8 = vsyncpa [#allocation3], 0
    %9 = vsyncpa [#allocation6], 0
    %10 = vsyncpa [#allocation4], 0
    // Predicated region
    $region2: #{tpu_custom_call.1} parent=1 // pred_check
      _
    $region3: #{tpu_custom_call.1} parent=1 // pred_check_branch
      %12 = sbr.rel (0) target = $region5
    $region4: #{tpu_custom_call.1} parent=1 // pred_region
      %s14 = ssub.s32 64, 64
      %15 = vsyncadd [#allocation3], %s14
      %s17 = sshll.u32 [#allocation2], 4
      %s18 = int_to_ptr.vmem [resolvable:$true] %s17
      %20 = dma.hbm_to_vmem [thread:$0]  %s0, 64, %s18, [#allocation3]
    $region5: #{tpu_custom_call.1} parent=1 // pred_fallthru
      _
    // Predicated region
    $region6: #{tpu_custom_call.1} parent=1 // pred_check
      _
    $region7: #{tpu_custom_call.1} parent=1 // pred_check_branch
      %22 = sbr.rel (0) target = $region9
    $region8: #{tpu_custom_call.1} parent=1 // pred_region
      %s24 = ssub.s32 512, 512
      %25 = vsyncadd [#allocation6], %s24
      %s26 = sshll.u32 [#allocation5], 4
      %s27 = int_to_ptr.vmem [resolvable:$true] %s26
      %32 = dma.hbm_to_vmem [thread:$0]  %s1, 512, %s27, [#allocation6], 128, 128, 8
    $region9: #{tpu_custom_call.1} parent=1 // pred_fallthru
      _
    // Predicated region
    $region10: #{tpu_custom_call.1} parent=1 // pred_check
      _
    $region11: #{tpu_custom_call.1} parent=1 // pred_check_branch
      %34 = sbr.rel (0) target = $region13
    $region12: #{tpu_custom_call.1} parent=1 // pred_region
      _
    $region13: #{tpu_custom_call.1} parent=1 // pred_fallthru
      _
    // Predicated region
    $region14: #{tpu_custom_call.1} parent=1 // pred_check
      _
    $region15: #{tpu_custom_call.1} parent=1 // pred_check_branch
      %36 = sbr.rel (0) target = $region17
    $region16: #{tpu_custom_call.1} parent=1 // pred_region
      %37 = dma.done [#allocation3], 64
    $region17: #{tpu_custom_call.1} parent=1 // pred_fallthru
      _
    // Predicated region
    $region18: #{tpu_custom_call.1} parent=1 // pred_check
      _
    $region19: #{tpu_custom_call.1} parent=1 // pred_check_branch
      %39 = sbr.rel (0) target = $region21
    $region20: #{tpu_custom_call.1} parent=1 // pred_region
      %40 = dma.done [#allocation6], 512
    $region21: #{tpu_custom_call.1} parent=1 // pred_fallthru
      _
    %v41 = vld [vmem:[#allocation2] sm:$0xf]
    %v42 = vld [vmem:[#allocation5] sm:$0xff]
    %v43 = vld [vmem:[#allocation5 + $0x8] sm:$0xff]
    %v44 = vld [vmem:[#allocation5 + $0x10] sm:$0xff]
    %v45 = vld [vmem:[#allocation5 + $0x18] sm:$0xff]
    %v46 = vld [vmem:[%s2] sm:$0x1]
    %v48 = vlaneseq
    %v49 = vshrl.u32 %v48, 7
    %v50 = vsub.s32 0, %v49
    %v51 = vrot.slane %v46, %v50
    %vm53 = vcmask 261120
    %v55 = vsel %vm53, %v41, 0
    %57 = vmatprep.subr.mxu0 0.0
    %58 = vmatpush1.msra.mxu0 0.0
    %59 = vmatprep.subr.mxu0 0.0
    %60 = vmatpush1.msra.mxu0 0.0
    %61 = vmatprep.subr.mxu0 0.0
    %62 = vmatpush1.msra.mxu0 0.0
    %63 = vmatprep.subr.mxu0 0.0
    %64 = vmatpush1.msra.mxu0 0.0
    %65 = vmatprep.subr.mxu0 0.0
    %66 = vmatpush1.msra.mxu0 0.0
    %67 = vmatprep.subr.mxu0 0.0
    %68 = vmatpush1.msra.mxu0 0.0
    %69 = vmatprep.subr.mxu0 0.0
    %70 = vmatpush1.msra.mxu0 0.0
    %71 = vmatprep.subr.mxu0 0.0
    %72 = vmatpush1.msra.mxu0 0.0
    %73 = vmatprep.subr.mxu0 0.0
    %74 = vmatpush1.msra.mxu0 0.0
    %75 = vmatprep.subr.mxu0 0.0
    %76 = vmatpush1.msra.mxu0 0.0
    %77 = vmatprep.subr.mxu0 0.0
    %78 = vmatpush1.msra.mxu0 0.0
    %79 = vmatprep.subr.mxu0 0.0
    %80 = vmatpush1.msra.mxu0 0.0
    %81 = vmatprep.subr.mxu0 0.0
    %82 = vmatpush1.msra.mxu0 %v45
    %83 = vmatprep.subr.mxu0 0.0
    %84 = vmatpush1.msra.mxu0 %v44
    %85 = vmatprep.subr.mxu0 0.0
    %86 = vmatpush1.msra.mxu0 %v43
    %87 = vmatprep.subr.mxu0 0.0
    %88 = vmatpush1.msra.mxu0 %v42
    %89 = vmatprep.subr.mxu0 0.0
    %90 = vmatpush2.msra.mxu0 0.0
    %91 = vmatprep.subr.mxu0 0.0
    %92 = vmatpush2.msra.mxu0 0.0
    %93 = vmatprep.subr.mxu0 0.0
    %94 = vmatpush2.msra.mxu0 0.0
    %95 = vmatprep.subr.mxu0 0.0
    %96 = vmatpush2.msra.mxu0 0.0
    %97 = vmatprep.subr.mxu0 0.0
    %98 = vmatpush2.msra.mxu0 0.0
    %99 = vmatprep.subr.mxu0 0.0
    %100 = vmatpush2.msra.mxu0 0.0
    %101 = vmatprep.subr.mxu0 0.0
    %102 = vmatpush2.msra.mxu0 0.0
    %103 = vmatprep.subr.mxu0 0.0
    %104 = vmatpush2.msra.mxu0 0.0
    %105 = vmatprep.subr.mxu0 0.0
    %106 = vmatpush2.msra.mxu0 0.0
    %107 = vmatprep.subr.mxu0 0.0
    %108 = vmatpush2.msra.mxu0 0.0
    %109 = vmatprep.subr.mxu0 0.0
    %110 = vmatpush2.msra.mxu0 0.0
    %111 = vmatprep.subr.mxu0 0.0
    %112 = vmatpush2.msra.mxu0 0.0
    %113 = vmatprep.subr.mxu0 0.0
    %114 = vmatpush2.msra.mxu0 0.0
    %115 = vmatprep.subr.mxu0 0.0
    %116 = vmatpush2.msra.mxu0 0.0
    %117 = vmatprep.subr.mxu0 0.0
    %118 = vmatpush2.msra.mxu0 0.0
    %119 = vmatprep.subr.mxu0 0.0
    %120 = vmatpush2.msra.mxu0 0.0
    %121 = vmatprep.mubr.f32.mxu0 0.0
    %122 = vmatmul.mubr.f32.gmra.mxu0 %v55
    %v123 = vpop.f32.mrf.mxu0
    %v124 = vadd.f32 %v51, %v123
    %v125 = vpop.f32.mrf.mxu0
    %126 = vdwg.mxu0
    %vm127 = vcmask 781312
    %128 = vst.msk [vmem:[#allocation7] sm:$0xf] %vm127, %v124
    // Predicated region
    $region22: #{tpu_custom_call.1} parent=1 // pred_check
      _
    $region23: #{tpu_custom_call.1} parent=1 // pred_check_branch
      %130 = sbr.rel (0) target = $region25
    $region24: #{tpu_custom_call.1} parent=1 // pred_region
      %s132 = ssub.s32 64, 64
      %133 = vsyncadd [#allocation4], %s132
      %s135 = sshll.u32 [#allocation7], 4
      %s136 = int_to_ptr.vmem [resolvable:$true] %s135
      %138 = dma.vmem_to_hbm [thread:$0]  %s136, 64, %s3, [#allocation4]
    $region25: #{tpu_custom_call.1} parent=1 // pred_fallthru
      _
    // Predicated region
    $region26: #{tpu_custom_call.1} parent=1 // pred_check
      _
    $region27: #{tpu_custom_call.1} parent=1 // pred_check_branch
      %140 = sbr.rel (0) target = $region29
    $region28: #{tpu_custom_call.1} parent=1 // pred_region
      %141 = dma.done [#allocation4], 64
    $region29: #{tpu_custom_call.1} parent=1 // pred_fallthru
      _
    %142 = vsyncpa [#allocation3], 1
    %143 = vsyncpa [#allocation6], 1
    %144 = vsyncpa [#allocation4], 1

</llo_original>
